<compile_context>
chip_gen: v7x
topology: tpu7x:2x2x1
jax: 0.10.0
libtpu: 0.0.40
codegen_flags: <defaults>
</compile_context>

<pallas_src>
import functools

import jax
import jax.numpy as jnp
from jax import lax
from jax.experimental import pallas as pl
from jax.experimental.pallas import tpu as pltpu


# ----------------------------- problem sizes ---------------------------------
V = 128          # vocab size (mlm vocab)
E = 32           # lmEmbed embedding size
D = 32           # encoder hidden size (encEmbed dim)
B = 2            # number of lines
M = 4            # m: candidates (n-best segmentations) per line
L = 8            # max tokens per candidate
LAM = 0.2        # lam smoothing

MINF_PAD_IDX = V          # minfPaddingIdx  (log_theta value -inf)
ZERO_PAD_IDX = V + 1      # zeroPaddingIdx  (log_theta value 0)

BM = B * M
BML = B * M * L

# Packed lane-dense output slab: one (BM + 8, 128) f32 tile.
#   rows [0, BM)      : cols [0, D) = yss, col D = attn, col D+1 = logPs
#   rows [BM, BM + B) : cols [0, D) = vss
#   element [BM, D]   : uniLoss
SLAB_COLS = 128
SLAB_ROWS = BM + 8
ATTN_COL = D
LOGP_COL = D + 1
LOSS_COL = D


# ------------------------- constant group matrix -------------------------------
def _group_sum_matrix(rows, cols, group):
    """(rows, cols) f32, 1 where col // group == row. Sums column-groups into rows."""
    r = lax.broadcasted_iota(jnp.int32, (rows, cols), 0)
    c = lax.broadcasted_iota(jnp.int32, (rows, cols), 1)
    return jnp.logical_and(c >= r * group, c < (r + 1) * group).astype(jnp.float32)


# --------------------------- fused OpTok kernel -------------------------------
def optok_kernel(ids_ref, nlm_w_ref, lm_embed_t_ref, enc_embed_ref, slab_ref,
                 *, b, m, l, vocab, d, lam, minf_idx, zero_idx):
    f32 = jnp.float32
    bm = b * m
    bml = b * m * l

    # ---- UnigramNLM.getLogUnigramProbs + lam smoothing ----
    # lmEmbed arrives pre-transposed (E, V): standard (1,E)x(E,V) MXU contraction,
    # no in-kernel XLU transpose of the weight tile.
    logits = jnp.dot(nlm_w_ref[...], lm_embed_t_ref[...],
                     preferred_element_type=f32)                      # (1, V)
    mx = jnp.max(logits, axis=-1, keepdims=True)
    sh = logits - mx
    lse = jnp.log(jnp.sum(jnp.exp(sh), axis=-1, keepdims=True))
    theta_s = lam * (sh - lse)                                        # lam * log_theta
    # (The -inf / 0 padding columns of the torch table are handled by the masks below.)

    # ---- token-level one-hot, lane-dense (BML, V), valid mask folded in ----
    ids = ids_ref[...]                                                # (BML, 1) int32
    valid = jnp.logical_and(ids != minf_idx, ids != zero_idx)         # (BML, 1)
    iota_v = lax.broadcasted_iota(jnp.int32, (1, vocab), 1)           # (1, V)
    onehot = jnp.logical_and(valid, ids == iota_v).astype(f32)        # (BML, V)

    # ---- reduce over L (token rows -> candidate rows) on the MXU ----
    red_l = _group_sum_matrix(bm, bml, l)                             # (BM, BML)
    counts = jnp.dot(red_l, onehot, preferred_element_type=f32)       # (BM, V)
    lens_c = jnp.sum(counts, axis=1, keepdims=True)                   # (BM, 1) valid tokens
    logp_c = jnp.sum(counts * theta_s, axis=1, keepdims=True)         # (BM, 1) sum log-probs
    # Pad candidates ([minfPaddingIdx]) contain only minf/zero-pad ids by construction of
    # idNbests, so valid-token count 0 <=> pad candidate (no extra MXU op needed).
    pad_c = lens_c < f32(0.5)                                         # (BM, 1)
    live = jnp.logical_not(pad_c)
    inv_len = f32(1.0) / jnp.maximum(lens_c, f32(1.0))                # exact VPU divide

    # ---- encode() stand-in fused as one MXU matmul ----
    # encEmbed arrives zero-padded to (V, 128) so yss is already lane-dense (cols >= D are 0).
    # TODO(synk): the external RNN `encoder` has no Pallas equivalent; it is approximated by
    # an order-invariant masked mean of encEmbed rows computed from the same counts matrix.
    yss = jnp.dot(counts, enc_embed_ref[...],
                  preferred_element_type=f32) * inv_len               # (BM, 128)

    # ---- __calcAttention: EXACT per-line softmax over the m candidates ----
    neg_inf = f32(-jnp.inf)
    big_neg = f32(-3e38)
    logps = jnp.where(pad_c, neg_inf, logp_c)                         # torch logPs, (BM, 1)
    row_c = lax.broadcasted_iota(jnp.int32, (bm, 1), 0)               # candidate row index
    attn = jnp.zeros((bm, 1), f32)
    # Tiny static unroll over the b lines: masked full-height VPU/XLU ops only, so the
    # attention critical path has zero MXU round trips and a correct per-line max.
    # TODO(synk): at real sizes, replace with a grid over B (parallel semantics).
    for bi in range(b):
        in_line = jnp.logical_and(
            jnp.logical_and(row_c >= bi * m, row_c < (bi + 1) * m), live)
        s_max = jnp.max(jnp.where(in_line, logp_c, big_neg), axis=0, keepdims=True)
        s_max = jnp.where(s_max < f32(-1e30), f32(0.0), s_max)        # all-pad line guard
        e = jnp.where(in_line, jnp.exp(logp_c - s_max), f32(0.0))
        s_sum = jnp.sum(e, axis=0, keepdims=True)                     # (1, 1)
        attn = attn + jnp.where(s_sum > f32(0.0), e / s_sum, f32(0.0))

    # ---- vss = matmul(attn.view(B,1,m), yss).squeeze(1); rows >= b of grp_sum are zero ----
    grp_sum = _group_sum_matrix(8, bm, m)                             # (8, BM)
    vss = jnp.dot(grp_sum, attn * yss, preferred_element_type=f32)    # (8, 128); cols>=D zero

    # ---- __getUnigramLoss ----
    nonpad_f = live.astype(f32)                                       # (BM, 1)
    contrib = jnp.where(pad_c, f32(0.0), (-logp_c) * attn * inv_len)  # (BM, 1)
    total = jnp.sum(contrib, axis=0, keepdims=True)                   # (1, 1)
    count = jnp.sum(nonpad_f, axis=0, keepdims=True)                  # (1, 1)
    loss = total / jnp.maximum(count, f32(1.0))                       # (1, 1), exact divide

    # ---- build the whole lane-dense slab in registers; ONE unmasked full-tile store ----
    lane_top = lax.broadcasted_iota(jnp.int32, (bm, SLAB_COLS), 1)
    top = jnp.where(lane_top == d, attn,
                    jnp.where(lane_top == d + 1, logps, yss))         # (BM, 128)
    lane_bot = lax.broadcasted_iota(jnp.int32, (8, SLAB_COLS), 1)
    row_bot = lax.broadcasted_iota(jnp.int32, (8, SLAB_COLS), 0)
    bottom = jnp.where(jnp.logical_and(row_bot == 0, lane_bot == d), loss, vss)  # (8, 128)
    slab_ref[...] = jnp.concatenate([top, bottom], axis=0)            # (BM + 8, 128)


@jax.jit
def optok_forward(idnbests, nlm_w, lm_embed, enc_embed):
    # Host-side layout prep of the STATIC parameters (outside the kernel):
    #  * lmEmbed transposed to (E, V) -> standard MXU contraction, no in-kernel transpose
    #  * encEmbed zero-padded to (V, 128) -> yss/vss land lane-dense inside the slab
    ids_col = idnbests.reshape(BML, 1).astype(jnp.int32)
    lm_embed_t = jnp.transpose(lm_embed)                              # (E, V)
    enc_embed_pad = jnp.concatenate(
        [enc_embed, jnp.zeros((V, SLAB_COLS - D), jnp.float32)], axis=1)  # (V, 128)

    vmem = pl.BlockSpec(memory_space=pltpu.MemorySpace.VMEM)
    kernel = functools.partial(
        optok_kernel, b=B, m=M, l=L, vocab=V, d=D, lam=LAM,
        minf_idx=MINF_PAD_IDX, zero_idx=ZERO_PAD_IDX)
    # TODO(synk): gridless single-core call is right for these toy sizes; at real sizes,
    # batch many lines per call and add a parallel grid over B
    # (dimension_semantics=("parallel",)) with tiles sized for v7x's 64 MiB VMEM per core.
    slab = pl.pallas_call(
        kernel,
        out_shape=jax.ShapeDtypeStruct((SLAB_ROWS, SLAB_COLS), jnp.float32),
        in_specs=[vmem, vmem, vmem, vmem],
        out_specs=vmem,
    )(ids_col, nlm_w, lm_embed_t, enc_embed_pad)

    # slice the packed slab apart (plain XLA, outside the kernel)
    yss = slab[:BM, :D].reshape(B, M, D)
    attn = slab[:BM, ATTN_COL].reshape(B, M)
    logps = slab[:BM, LOGP_COL].reshape(B, M)
    vss = slab[BM:BM + B, :D]
    loss = slab[BM, LOSS_COL]
    return vss, attn, logps, loss, yss


# --------------------------------- glue ---------------------------------------
def make_synthetic_idnbests(key):
    # TODO(synk): mlm.makeIdTable + mdp.mSampleFromNBestIdSegmentation (A* n-best DP over
    # strings) have no Pallas equivalent; deterministic synthetic id tables are used instead.
    k1, k2 = jax.random.split(key)
    ids = jax.random.randint(k1, (B, M, L), 0, V, dtype=jnp.int32)
    lens = jax.random.randint(k2, (B, M), 1, L + 1, dtype=jnp.int32)
    pos = jnp.arange(L, dtype=jnp.int32)[None, None, :]
    ids = jnp.where(pos < lens[:, :, None], ids, ZERO_PAD_IDX)
    # emulate an n-best list shorter than m for the last line: pad candidate ([minfPaddingIdx],)
    pad_row = jnp.concatenate(
        [jnp.array([MINF_PAD_IDX], dtype=jnp.int32),
         jnp.full((L - 1,), ZERO_PAD_IDX, dtype=jnp.int32)])
    ids = ids.at[B - 1, M - 1].set(pad_row)
    return ids


def run():
    key = jax.random.PRNGKey(0)
    k_ids, k_lm, k_enc, k_w = jax.random.split(key, 4)

    # deterministic "parameters" (shapes implied by the module's __init__)
    lm_embed = jax.random.normal(k_lm, (V, E), jnp.float32) * 0.1     # self.lmEmbed.weight
    enc_embed = jax.random.normal(k_enc, (V, D), jnp.float32) * 0.1   # self.encEmbed.weight
    nlm_w = jax.random.normal(k_w, (1, E), jnp.float32) * 0.1         # UnigramNLM scoring vec

    # __getNbests (synthetic)
    idnbests = make_synthetic_idnbests(k_ids)                         # (B, M, L) int32

    # __getLogTheta + lam smoothing + __calcAttention + encode + vss + __getUnigramLoss,
    # all fused in one Pallas call with a single lane-dense output slab.
    vss, attn, logps, loss, yss = optok_forward(idnbests, nlm_w, lm_embed, enc_embed)

    attn = attn.reshape(B, 1, M)      # matches torch attn.view(len(lines), -1, m)
    # TODO(synk): nbests (string segmentations) and hss (per-token RNN hidden states of the
    # external encoder) have no Pallas equivalent and are not produced.
    hss = None
    return vss, loss, attn, logps, yss, hss


if __name__ == "__main__":
    vss, uni_loss, attn, logps, yss, hss = run()
    vss, uni_loss, attn, logps, yss = jax.block_until_ready(
        (vss, uni_loss, attn, logps, yss))
    assert vss.shape == (B, D)
    assert attn.shape == (B, 1, M)
    assert yss.shape == (B, M, D)
    assert logps.shape == (B, M)
    assert bool(jnp.isfinite(uni_loss))
    # exact per-line softmax + exact division => tight tolerance
    assert bool(jnp.all(jnp.abs(jnp.sum(attn, axis=-1) - 1.0) < 1e-4))
    assert bool(jnp.all(attn >= 0.0))
    print("KERNEL_OK")
</pallas_src>

<mosaic_0001>
module attributes {stable_mosaic.version = 11 : i64} {
  func.func @optok_kernel(%arg0: memref<64x1xi32, #tpu.memory_space<vmem>>, %arg1: memref<1x32xf32, #tpu.memory_space<vmem>>, %arg2: memref<32x128xf32, #tpu.memory_space<vmem>>, %arg3: memref<128x128xf32, #tpu.memory_space<vmem>>, %arg4: memref<16x128xf32, #tpu.memory_space<vmem>>) attributes {dimension_semantics = [], scalar_prefetch = 0 : i64, scratch_operands = 0 : i64, tpu.core_type = #tpu.core_type<tc>} {
    %c0 = arith.constant 0 : index
    %c0_0 = arith.constant 0 : index
    %0 = vector.load %arg1[%c0, %c0_0] : memref<1x32xf32, #tpu.memory_space<vmem>>, vector<1x32xf32>
    %c0_1 = arith.constant 0 : index
    %c0_2 = arith.constant 0 : index
    %1 = vector.load %arg2[%c0_1, %c0_2] : memref<32x128xf32, #tpu.memory_space<vmem>>, vector<32x128xf32>
    %cst = arith.constant dense<0.000000e+00> : vector<1x128xf32>
    %2 = tpu.matmul %0, %1, %cst {dimension_numbers = #tpu.dot_dimension_numbers<[1], [0], [0], [1], [0, 0, 1, 1], [], []>} : vector<1x32xf32>, vector<32x128xf32>, vector<1x128xf32> -> vector<1x128xf32>
    %cst_3 = arith.constant dense<0xFF800000> : vector<1xf32>
    %3 = vector.multi_reduction <maximumf>, %2, %cst_3 [1] : vector<1x128xf32> to vector<1xf32>
    %4 = vector.shape_cast %3 : vector<1xf32> to vector<1x1xf32>
    %5 = vector.broadcast %4 : vector<1x1xf32> to vector<1x128xf32>
    %6 = arith.subf %2, %5 : vector<1x128xf32>
    %7 = math.exp %6 : vector<1x128xf32>
    %cst_4 = arith.constant dense<0.000000e+00> : vector<1xf32>
    %8 = vector.multi_reduction <add>, %7, %cst_4 [1] : vector<1x128xf32> to vector<1xf32>
    %9 = vector.shape_cast %8 : vector<1xf32> to vector<1x1xf32>
    %10 = math.log %9 : vector<1x1xf32>
    %11 = vector.broadcast %10 : vector<1x1xf32> to vector<1x128xf32>
    %12 = arith.subf %6, %11 : vector<1x128xf32>
    %cst_5 = arith.constant 2.000000e-01 : f32
    %13 = vector.broadcast %cst_5 : f32 to vector<1x128xf32>
    %14 = arith.mulf %13, %12 : vector<1x128xf32>
    %c0_6 = arith.constant 0 : index
    %c0_7 = arith.constant 0 : index
    %15 = vector.load %arg0[%c0_6, %c0_7] : memref<64x1xi32, #tpu.memory_space<vmem>>, vector<64x1xi32>
    %c128_i32 = arith.constant 128 : i32
    %16 = vector.broadcast %c128_i32 : i32 to vector<64x1xi32>
    %17 = arith.cmpi ne, %15, %16 : vector<64x1xi32>
    %c129_i32 = arith.constant 129 : i32
    %18 = vector.broadcast %c129_i32 : i32 to vector<64x1xi32>
    %19 = arith.cmpi ne, %15, %18 : vector<64x1xi32>
    %20 = arith.andi %17, %19 : vector<64x1xi1>
    %21 = tpu.iota {dimensions = array<i32: 1>} : vector<1x128xi32>
    %22 = vector.broadcast %15 : vector<64x1xi32> to vector<64x128xi32>
    %23 = vector.broadcast %21 : vector<1x128xi32> to vector<64x128xi32>
    %24 = arith.cmpi eq, %22, %23 : vector<64x128xi32>
    %25 = vector.broadcast %20 : vector<64x1xi1> to vector<64x128xi1>
    %26 = arith.andi %25, %24 : vector<64x128xi1>
    %27 = arith.extui %26 : vector<64x128xi1> to vector<64x128xi32>
    %28 = arith.sitofp %27 : vector<64x128xi32> to vector<64x128xf32>
    %29 = tpu.iota {dimensions = array<i32: 0>} : vector<8x64xi32>
    %30 = tpu.iota {dimensions = array<i32: 1>} : vector<8x64xi32>
    %c8_i32 = arith.constant 8 : i32
    %31 = vector.broadcast %c8_i32 : i32 to vector<8x64xi32>
    %32 = arith.muli %29, %31 : vector<8x64xi32>
    %33 = arith.cmpi sge, %30, %32 : vector<8x64xi32>
    %c1_i32 = arith.constant 1 : i32
    %34 = vector.broadcast %c1_i32 : i32 to vector<8x64xi32>
    %35 = arith.addi %29, %34 : vector<8x64xi32>
    %c8_i32_8 = arith.constant 8 : i32
    %36 = vector.broadcast %c8_i32_8 : i32 to vector<8x64xi32>
    %37 = arith.muli %35, %36 : vector<8x64xi32>
    %38 = arith.cmpi slt, %30, %37 : vector<8x64xi32>
    %39 = arith.andi %33, %38 : vector<8x64xi1>
    %40 = arith.extui %39 : vector<8x64xi1> to vector<8x64xi32>
    %41 = arith.sitofp %40 : vector<8x64xi32> to vector<8x64xf32>
    %cst_9 = arith.constant dense<0.000000e+00> : vector<8x128xf32>
    %42 = tpu.matmul %41, %28, %cst_9 {dimension_numbers = #tpu.dot_dimension_numbers<[1], [0], [0], [1], [0, 0, 1, 1], [], []>} : vector<8x64xf32>, vector<64x128xf32>, vector<8x128xf32> -> vector<8x128xf32>
    %cst_10 = arith.constant dense<0.000000e+00> : vector<8xf32>
    %43 = vector.multi_reduction <add>, %42, %cst_10 [1] : vector<8x128xf32> to vector<8xf32>
    %44 = vector.shape_cast %43 : vector<8xf32> to vector<8x1xf32>
    %45 = vector.broadcast %14 : vector<1x128xf32> to vector<8x128xf32>
    %46 = arith.mulf %42, %45 : vector<8x128xf32>
    %cst_11 = arith.constant dense<0.000000e+00> : vector<8xf32>
    %47 = vector.multi_reduction <add>, %46, %cst_11 [1] : vector<8x128xf32> to vector<8xf32>
    %48 = vector.shape_cast %47 : vector<8xf32> to vector<8x1xf32>
    %cst_12 = arith.constant 5.000000e-01 : f32
    %49 = vector.broadcast %cst_12 : f32 to vector<8x1xf32>
    %50 = arith.cmpf olt, %44, %49 : vector<8x1xf32>
    %cst_13 = arith.constant dense<true> : vector<8x1xi1>
    %51 = arith.xori %50, %cst_13 : vector<8x1xi1>
    %cst_14 = arith.constant 1.000000e+00 : f32
    %52 = vector.broadcast %cst_14 : f32 to vector<8x1xf32>
    %53 = arith.maximumf %44, %52 : vector<8x1xf32>
    %cst_15 = arith.constant 1.000000e+00 : f32
    %54 = vector.broadcast %cst_15 : f32 to vector<8x1xf32>
    %55 = arith.divf %54, %53 : vector<8x1xf32>
    %c0_16 = arith.constant 0 : index
    %c0_17 = arith.constant 0 : index
    %56 = vector.load %arg3[%c0_16, %c0_17] : memref<128x128xf32, #tpu.memory_space<vmem>>, vector<128x128xf32>
    %cst_18 = arith.constant dense<0.000000e+00> : vector<8x128xf32>
    %57 = tpu.matmul %42, %56, %cst_18 {dimension_numbers = #tpu.dot_dimension_numbers<[1], [0], [0], [1], [0, 0, 1, 1], [], []>} : vector<8x128xf32>, vector<128x128xf32>, vector<8x128xf32> -> vector<8x128xf32>
    %58 = vector.broadcast %55 : vector<8x1xf32> to vector<8x128xf32>
    %59 = arith.mulf %57, %58 : vector<8x128xf32>
    %cst_19 = arith.constant 0xFF800000 : f32
    %60 = vector.broadcast %cst_19 : f32 to vector<8x1xf32>
    %61 = arith.select %50, %60, %48 : vector<8x1xi1>, vector<8x1xf32>
    %62 = tpu.iota {dimensions = array<i32: 0>} : vector<8x1xi32>
    %cst_20 = arith.constant 0.000000e+00 : f32
    %63 = vector.broadcast %cst_20 : f32 to vector<8x1xf32>
    %c0_i32 = arith.constant 0 : i32
    %64 = vector.broadcast %c0_i32 : i32 to vector<8x1xi32>
    %65 = arith.cmpi sge, %62, %64 : vector<8x1xi32>
    %c4_i32 = arith.constant 4 : i32
    %66 = vector.broadcast %c4_i32 : i32 to vector<8x1xi32>
    %67 = arith.cmpi slt, %62, %66 : vector<8x1xi32>
    %68 = arith.andi %65, %67 : vector<8x1xi1>
    %69 = arith.andi %68, %51 : vector<8x1xi1>
    %cst_21 = arith.constant -3.000000e+38 : f32
    %70 = vector.broadcast %cst_21 : f32 to vector<8x1xf32>
    %71 = arith.select %69, %48, %70 : vector<8x1xi1>, vector<8x1xf32>
    %cst_22 = arith.constant dense<0xFF800000> : vector<1xf32>
    %72 = vector.multi_reduction <maximumf>, %71, %cst_22 [0] : vector<8x1xf32> to vector<1xf32>
    %73 = vector.shape_cast %72 : vector<1xf32> to vector<1x1xf32>
    %cst_23 = arith.constant -1.000000e+30 : f32
    %74 = vector.broadcast %cst_23 : f32 to vector<1x1xf32>
    %75 = arith.cmpf olt, %73, %74 : vector<1x1xf32>
    %cst_24 = arith.constant 0.000000e+00 : f32
    %76 = vector.broadcast %cst_24 : f32 to vector<1x1xf32>
    %77 = arith.select %75, %76, %73 : vector<1x1xi1>, vector<1x1xf32>
    %78 = vector.broadcast %77 : vector<1x1xf32> to vector<8x1xf32>
    %79 = arith.subf %48, %78 : vector<8x1xf32>
    %80 = math.exp %79 : vector<8x1xf32>
    %cst_25 = arith.constant 0.000000e+00 : f32
    %81 = vector.broadcast %cst_25 : f32 to vector<8x1xf32>
    %82 = arith.select %69, %80, %81 : vector<8x1xi1>, vector<8x1xf32>
    %cst_26 = arith.constant dense<0.000000e+00> : vector<1xf32>
    %83 = vector.multi_reduction <add>, %82, %cst_26 [0] : vector<8x1xf32> to vector<1xf32>
    %84 = vector.shape_cast %83 : vector<1xf32> to vector<1x1xf32>
    %cst_27 = arith.constant 0.000000e+00 : f32
    %85 = vector.broadcast %cst_27 : f32 to vector<1x1xf32>
    %86 = arith.cmpf ogt, %84, %85 : vector<1x1xf32>
    %87 = vector.broadcast %84 : vector<1x1xf32> to vector<8x1xf32>
    %88 = arith.divf %82, %87 : vector<8x1xf32>
    %cst_28 = arith.constant 0.000000e+00 : f32
    %89 = vector.shape_cast %86 : vector<1x1xi1> to vector<1x1xi1>
    %90 = vector.broadcast %89 : vector<1x1xi1> to vector<8x1xi1>
    %91 = vector.broadcast %cst_28 : f32 to vector<8x1xf32>
    %92 = arith.select %90, %88, %91 : vector<8x1xi1>, vector<8x1xf32>
    %93 = arith.addf %63, %92 : vector<8x1xf32>
    %c4_i32_29 = arith.constant 4 : i32
    %94 = vector.broadcast %c4_i32_29 : i32 to vector<8x1xi32>
    %95 = arith.cmpi sge, %62, %94 : vector<8x1xi32>
    %c8_i32_30 = arith.constant 8 : i32
    %96 = vector.broadcast %c8_i32_30 : i32 to vector<8x1xi32>
    %97 = arith.cmpi slt, %62, %96 : vector<8x1xi32>
    %98 = arith.andi %95, %97 : vector<8x1xi1>
    %99 = arith.andi %98, %51 : vector<8x1xi1>
    %cst_31 = arith.constant -3.000000e+38 : f32
    %100 = vector.broadcast %cst_31 : f32 to vector<8x1xf32>
    %101 = arith.select %99, %48, %100 : vector<8x1xi1>, vector<8x1xf32>
    %cst_32 = arith.constant dense<0xFF800000> : vector<1xf32>
    %102 = vector.multi_reduction <maximumf>, %101, %cst_32 [0] : vector<8x1xf32> to vector<1xf32>
    %103 = vector.shape_cast %102 : vector<1xf32> to vector<1x1xf32>
    %cst_33 = arith.constant -1.000000e+30 : f32
    %104 = vector.broadcast %cst_33 : f32 to vector<1x1xf32>
    %105 = arith.cmpf olt, %103, %104 : vector<1x1xf32>
    %cst_34 = arith.constant 0.000000e+00 : f32
    %106 = vector.broadcast %cst_34 : f32 to vector<1x1xf32>
    %107 = arith.select %105, %106, %103 : vector<1x1xi1>, vector<1x1xf32>
    %108 = vector.broadcast %107 : vector<1x1xf32> to vector<8x1xf32>
    %109 = arith.subf %48, %108 : vector<8x1xf32>
    %110 = math.exp %109 : vector<8x1xf32>
    %cst_35 = arith.constant 0.000000e+00 : f32
    %111 = vector.broadcast %cst_35 : f32 to vector<8x1xf32>
    %112 = arith.select %99, %110, %111 : vector<8x1xi1>, vector<8x1xf32>
    %cst_36 = arith.constant dense<0.000000e+00> : vector<1xf32>
    %113 = vector.multi_reduction <add>, %112, %cst_36 [0] : vector<8x1xf32> to vector<1xf32>
    %114 = vector.shape_cast %113 : vector<1xf32> to vector<1x1xf32>
    %cst_37 = arith.constant 0.000000e+00 : f32
    %115 = vector.broadcast %cst_37 : f32 to vector<1x1xf32>
    %116 = arith.cmpf ogt, %114, %115 : vector<1x1xf32>
    %117 = vector.broadcast %114 : vector<1x1xf32> to vector<8x1xf32>
    %118 = arith.divf %112, %117 : vector<8x1xf32>
    %cst_38 = arith.constant 0.000000e+00 : f32
    %119 = vector.shape_cast %116 : vector<1x1xi1> to vector<1x1xi1>
    %120 = vector.broadcast %119 : vector<1x1xi1> to vector<8x1xi1>
    %121 = vector.broadcast %cst_38 : f32 to vector<8x1xf32>
    %122 = arith.select %120, %118, %121 : vector<8x1xi1>, vector<8x1xf32>
    %123 = arith.addf %93, %122 : vector<8x1xf32>
    %124 = tpu.iota {dimensions = array<i32: 0>} : vector<8x8xi32>
    %125 = tpu.iota {dimensions = array<i32: 1>} : vector<8x8xi32>
    %c4_i32_39 = arith.constant 4 : i32
    %126 = vector.broadcast %c4_i32_39 : i32 to vector<8x8xi32>
    %127 = arith.muli %124, %126 : vector<8x8xi32>
    %128 = arith.cmpi sge, %125, %127 : vector<8x8xi32>
    %c1_i32_40 = arith.constant 1 : i32
    %129 = vector.broadcast %c1_i32_40 : i32 to vector<8x8xi32>
    %130 = arith.addi %124, %129 : vector<8x8xi32>
    %c4_i32_41 = arith.constant 4 : i32
    %131 = vector.broadcast %c4_i32_41 : i32 to vector<8x8xi32>
    %132 = arith.muli %130, %131 : vector<8x8xi32>
    %133 = arith.cmpi slt, %125, %132 : vector<8x8xi32>
    %134 = arith.andi %128, %133 : vector<8x8xi1>
    %135 = arith.extui %134 : vector<8x8xi1> to vector<8x8xi32>
    %136 = arith.sitofp %135 : vector<8x8xi32> to vector<8x8xf32>
    %137 = vector.broadcast %123 : vector<8x1xf32> to vector<8x128xf32>
    %138 = arith.mulf %137, %59 : vector<8x128xf32>
    %cst_42 = arith.constant dense<0.000000e+00> : vector<8x128xf32>
    %139 = tpu.matmul %136, %138, %cst_42 {dimension_numbers = #tpu.dot_dimension_numbers<[1], [0], [0], [1], [0, 0, 1, 1], [], []>} : vector<8x8xf32>, vector<8x128xf32>, vector<8x128xf32> -> vector<8x128xf32>
    %140 = arith.extui %51 : vector<8x1xi1> to vector<8x1xi32>
    %141 = arith.sitofp %140 : vector<8x1xi32> to vector<8x1xf32>
    %cst_43 = arith.constant 0.000000e+00 : f32
    %142 = vector.broadcast %cst_43 : f32 to vector<8x1xf32>
    %143 = arith.subf %142, %48 : vector<8x1xf32>
    %144 = arith.mulf %143, %123 : vector<8x1xf32>
    %145 = arith.mulf %144, %55 : vector<8x1xf32>
    %cst_44 = arith.constant 0.000000e+00 : f32
    %146 = vector.broadcast %cst_44 : f32 to vector<8x1xf32>
    %147 = arith.select %50, %146, %145 : vector<8x1xi1>, vector<8x1xf32>
    %cst_45 = arith.constant dense<0.000000e+00> : vector<1xf32>
    %148 = vector.multi_reduction <add>, %147, %cst_45 [0] : vector<8x1xf32> to vector<1xf32>
    %149 = vector.shape_cast %148 : vector<1xf32> to vector<1x1xf32>
    %cst_46 = arith.constant dense<0.000000e+00> : vector<1xf32>
    %150 = vector.multi_reduction <add>, %141, %cst_46 [0] : vector<8x1xf32> to vector<1xf32>
    %151 = vector.shape_cast %150 : vector<1xf32> to vector<1x1xf32>
    %cst_47 = arith.constant 1.000000e+00 : f32
    %152 = vector.broadcast %cst_47 : f32 to vector<1x1xf32>
    %153 = arith.maximumf %151, %152 : vector<1x1xf32>
    %154 = arith.divf %149, %153 : vector<1x1xf32>
    %155 = tpu.iota {dimensions = array<i32: 1>} : vector<8x128xi32>
    %c32_i32 = arith.constant 32 : i32
    %156 = vector.broadcast %c32_i32 : i32 to vector<8x128xi32>
    %157 = arith.cmpi eq, %155, %156 : vector<8x128xi32>
    %c33_i32 = arith.constant 33 : i32
    %158 = vector.broadcast %c33_i32 : i32 to vector<8x128xi32>
    %159 = arith.cmpi eq, %155, %158 : vector<8x128xi32>
    %160 = vector.shape_cast %61 : vector<8x1xf32> to vector<8x1xf32>
    %161 = vector.broadcast %160 : vector<8x1xf32> to vector<8x128xf32>
    %162 = arith.select %159, %161, %59 : vector<8x128xi1>, vector<8x128xf32>
    %163 = vector.shape_cast %123 : vector<8x1xf32> to vector<8x1xf32>
    %164 = vector.broadcast %163 : vector<8x1xf32> to vector<8x128xf32>
    %165 = arith.select %157, %164, %162 : vector<8x128xi1>, vector<8x128xf32>
    %166 = tpu.iota {dimensions = array<i32: 1>} : vector<8x128xi32>
    %167 = tpu.iota {dimensions = array<i32: 0>} : vector<8x128xi32>
    %c0_i32_48 = arith.constant 0 : i32
    %168 = vector.broadcast %c0_i32_48 : i32 to vector<8x128xi32>
    %169 = arith.cmpi eq, %167, %168 : vector<8x128xi32>
    %c32_i32_49 = arith.constant 32 : i32
    %170 = vector.broadcast %c32_i32_49 : i32 to vector<8x128xi32>
    %171 = arith.cmpi eq, %166, %170 : vector<8x128xi32>
    %172 = arith.andi %169, %171 : vector<8x128xi1>
    %173 = vector.shape_cast %154 : vector<1x1xf32> to vector<1x1xf32>
    %174 = vector.broadcast %173 : vector<1x1xf32> to vector<8x128xf32>
    %175 = arith.select %172, %174, %139 : vector<8x128xi1>, vector<8x128xf32>
    %176 = tpu.concatenate %165, %175 in 0 : vector<8x128xf32>, vector<8x128xf32> -> vector<16x128xf32>
    %c0_50 = arith.constant 0 : index
    %c0_51 = arith.constant 0 : index
    %177 = vector.load %arg4[%c0_50, %c0_51] : memref<16x128xf32, #tpu.memory_space<vmem>>, vector<16x128xf32>
    tpu.vector_store %arg4[%c0_50, %c0_51], %176 {strides = array<i32>} : memref<16x128xf32, #tpu.memory_space<vmem>>, vector<16x128xf32>,
    return
  }
}

</mosaic_0001>

<llo_original>
// kernel: squeeze.3
$region0: #{squeeze.3}
  %s0 = inlined_call_operand.vmem [shape: f32[8], index: 0, kind: input, shape index: {}]
  %s1 = inlined_call_operand.hbm [shape: f32[2,4], index: 1, kind: output, shape index: {}]
  $region1: #{squeeze.3} parent=0
    #allocation0 [shape = 'u8[1024]{0}', space=vmem, size = 0x400, scoped, tag = 'operand span for operand 1']
    #allocation1 [shape = 's32[1]{0}', space=sflag, size = 0x4, scoped, tag = 'scoped memory for squeeze.3']
    #allocation2 [shape = 'u8[4096]{0}', space=vmem, size = 0x1000, scoped, tag = 'scoped mem for output reshape']
    #allocation3 [shape = 'u8[4096]{0}', space=vmem, size = 0x1000, scoped, tag = 'scoped mem for input reshape']
    %2 = vsyncpa [#allocation1], 0
    %s4 = sshllo.u32 0, 1
    %v5 = vld [vmem:[%s0] sm:%s4]
    %6 = vst [vmem:[#allocation3] sm:%s4] %v5
    %v7 = vld [vmem:[#allocation3] sm:$0x1]
    %vm8 = vcmask 31744
    %9 = vst.msk [vmem:[#allocation2] sm:$0x1] %vm8, %v7
    %v10 = vld [vmem:[#allocation3] sm:$0x1]
    %11 = vrot.lane.b32.xlu0 %v10, 124
    %v12 = vpop.permute.xlu0 %11
    %vm13 = vcmask 31744
    %s14 = scalar_lea.vmem [#allocation2], 1
    %15 = vst.msk [vmem:[%s14] sm:$0x1] %vm13, %v12
    %s17 = sshllo.u32 0, 2
    %v19 = vld [vmem:[#allocation2] sm:%s17]
    %s20 = sshllo.u32 0, 2
    %21 = vst [vmem:[#allocation0] sm:%s20] %v19
    %s23 = ssub.s32 32, 32
    %24 = vsyncadd [#allocation1], %s23
    %s26 = sshll.u32 [#allocation0], 4
    %s27 = int_to_ptr.vmem [resolvable:$true] %s26
    %29 = dma.vmem_to_hbm [thread:$0]  %s27, 32, %s1, [#allocation1]
    %30 = dma.done [#allocation1], 32
    %31 = vsyncpa [#allocation1], 1

// kernel: optok_forward.1
$region0: #{optok_forward.1}
  #allocation0 [shape = 'u32[]', space=smem, size = 0x4, offset = 0x4, fixed_abs, tag = 'smem constant byte address 0x4 - core index']
  #allocation1 [shape = 'u32[144,128]{1,0:T(1,128)}', space=vmem, size = 0x12000, scoped, tag = 'internal scratch']
  %s0 = inlined_call_operand.vmem [shape: s32[64,1], index: 0, kind: input, shape index: {}]
  %s1 = inlined_call_operand.vmem [shape: f32[1,32], index: 1, kind: input, shape index: {}]
  %s2 = inlined_call_operand.vmem [shape: f32[32,128], index: 2, kind: input, shape index: {}]
  %s3 = inlined_call_operand.vmem [shape: f32[128,128], index: 3, kind: input, shape index: {}]
  %s4 = inlined_call_operand.vmem [shape: f32[16,128], index: 4, kind: output, shape index: {}]
  %s5 = sld [smem:[#allocation0]]
  $region26: #{optok_forward.1} parent=0
    _
  %s7 = ssub.s32 1, %s5
  %s8 = scalar_select 0, %s7, %s5
  // Predicated region
  $region2: #{optok_forward.1} parent=0 // pred_check
    _
  $region3: #{optok_forward.1} parent=0 // pred_check_branch
    %10 = sbr.rel (0) target = $region5
  $region4: #{optok_forward.1} parent=0 // pred_region
    _
  $region5: #{optok_forward.1} parent=0 // pred_fallthru
    _
  // Predicated region
  $region6: #{optok_forward.1} parent=0 // pred_check
    _
  $region7: #{optok_forward.1} parent=0 // pred_check_branch
    %12 = sbr.rel (0) target = $region9
  $region8: #{optok_forward.1} parent=0 // pred_region
    _
  $region9: #{optok_forward.1} parent=0 // pred_fallthru
    _
  // Predicated region
  $region10: #{optok_forward.1} parent=0 // pred_check
    _
  $region11: #{optok_forward.1} parent=0 // pred_check_branch
    %14 = sbr.rel (0) target = $region13
  $region12: #{optok_forward.1} parent=0 // pred_region
    _
  $region13: #{optok_forward.1} parent=0 // pred_fallthru
    _
  // Predicated region
  $region14: #{optok_forward.1} parent=0 // pred_check
    _
  $region15: #{optok_forward.1} parent=0 // pred_check_branch
    %16 = sbr.rel (0) target = $region17
  $region16: #{optok_forward.1} parent=0 // pred_region
    _
  $region17: #{optok_forward.1} parent=0 // pred_fallthru
    _
  %v17 = vld [vmem:[%s1] sm:$0x1]
  %v18 = vld [vmem:[%s2] sm:$0xff]
  %v19 = vld [vmem:[%s2 + $0x8] sm:$0xff]
  %v20 = vld [vmem:[%s2 + $0x10] sm:$0xff]
  %v21 = vld [vmem:[%s2 + $0x18] sm:$0xff]
  %vm22 = vcmask 261120
  %v24 = vsel %vm22, %v17, 0
  %26 = vmatprep.subr.mxu0 0.0
  %27 = vmatpush1.msra.mxu0 %v18
  %28 = vmatprep.subr.mxu0 0.0
  %29 = vmatpush1.msra.mxu0 %v19
  %30 = vmatprep.subr.mxu0 0.0
  %31 = vmatpush1.msra.mxu0 %v20
  %32 = vmatprep.subr.mxu0 0.0
  %33 = vmatpush1.msra.mxu0 %v21
  %34 = vmatprep.subr.mxu0 0.0
  %35 = vmatpush1.msra.mxu0 0.0
  %36 = vmatprep.subr.mxu0 0.0
  %37 = vmatpush1.msra.mxu0 0.0
  %38 = vmatprep.subr.mxu0 0.0
  %39 = vmatpush1.msra.mxu0 0.0
  %40 = vmatprep.subr.mxu0 0.0
  %41 = vmatpush1.msra.mxu0 0.0
  %42 = vmatprep.subr.mxu0 0.0
  %43 = vmatpush1.msra.mxu0 0.0
  %44 = vmatprep.subr.mxu0 0.0
  %45 = vmatpush1.msra.mxu0 0.0
  %46 = vmatprep.subr.mxu0 0.0
  %47 = vmatpush1.msra.mxu0 0.0
  %48 = vmatprep.subr.mxu0 0.0
  %49 = vmatpush1.msra.mxu0 0.0
  %50 = vmatprep.subr.mxu0 0.0
  %51 = vmatpush1.msra.mxu0 0.0
  %52 = vmatprep.subr.mxu0 0.0
  %53 = vmatpush1.msra.mxu0 0.0
  %54 = vmatprep.subr.mxu0 0.0
  %55 = vmatpush1.msra.mxu0 0.0
  %56 = vmatprep.subr.mxu0 0.0
  %57 = vmatpush1.msra.mxu0 0.0
  %58 = vmatprep.subr.mxu0 0.0
  %59 = vmatpush1.msra.mxu0 0.0
  %60 = vmatprep.subr.mxu0 0.0
  %61 = vmatpush1.msra.mxu0 0.0
  %62 = vmatprep.subr.mxu0 0.0
  %63 = vmatpush1.msra.mxu0 0.0
  %64 = vmatprep.subr.mxu0 0.0
  %65 = vmatpush1.msra.mxu0 0.0
  %66 = vmatprep.subr.mxu0 0.0
  %67 = vmatpush1.msra.mxu0 0.0
  %68 = vmatprep.subr.mxu0 0.0
  %69 = vmatpush1.msra.mxu0 0.0
  %70 = vmatprep.subr.mxu0 0.0
  %71 = vmatpush1.msra.mxu0 0.0
  %72 = vmatprep.subr.mxu0 0.0
  %73 = vmatpush1.msra.mxu0 0.0
  %74 = vmatprep.subr.mxu0 0.0
  %75 = vmatpush1.msra.mxu0 0.0
  %76 = vmatprep.subr.mxu0 0.0
  %77 = vmatpush1.msra.mxu0 0.0
  %78 = vmatprep.subr.mxu0 0.0
  %79 = vmatpush1.msra.mxu0 0.0
  %80 = vmatprep.subr.mxu0 0.0
  %81 = vmatpush1.msra.mxu0 0.0
  %82 = vmatprep.subr.mxu0 0.0
  %83 = vmatpush1.msra.mxu0 0.0
  %84 = vmatprep.subr.mxu0 0.0
  %85 = vmatpush1.msra.mxu0 0.0
  %86 = vmatprep.subr.mxu0 0.0
  %87 = vmatpush1.msra.mxu0 0.0
  %88 = vmatprep.subr.mxu0 0.0
  %89 = vmatpush1.msra.mxu0 0.0
  %90 = vmatprep.mubr.f32.mxu0 0.0
  %91 = vmatmul.mubr.f32.gmra.mrb[0].mxu0 %v24
  %v92 = vpop.f32.mrb[0].mxu0
  %v93 = vadd.f32 0.0, %v92
  %v94 = vpop.f32.mrb[0].mxu0
  %95 = vdwg.mxu0
  %vm96 = vcmask 1040384
  %v97 = vsel %vm96, %v93, -inf
  %98 = vmax.xlane.f32.xlu0 %v97
  %v99 = vpop.xlane.xlu0 %98
  %v100 = vsub.f32 %v93, %v99
  %v101 = vmul.f32 %v100, 1.442695
  %v102 = vpow.pop %v101
  %v103 = vsel %vm96, %v102, 0.0
  %104 = vadd.xlane.f32.xlu0 %v103
  %v105 = vpop.xlane.xlu0 %104
  %v106 = vlog2.pop %v105
  %v107 = vmul.f32 %v106, 0.6931472
  %v108 = vsub.f32 %v100, %v107
  %v109 = vmul.f32 %v108, 0.2
  %v110 = vld [vmem:[%s0] sm:$0xff]
  %v111 = vld [vmem:[%s0 + $0x8] sm:$0xff]
  %v112 = vld [vmem:[%s0 + $0x10] sm:$0xff]
  %v113 = vld [vmem:[%s0 + $0x18] sm:$0xff]
  %v114 = vld [vmem:[%s0 + $0x20] sm:$0xff]
  %v115 = vld [vmem:[%s0 + $0x28] sm:$0xff]
  %v116 = vld [vmem:[%s0 + $0x30] sm:$0xff]
  %v117 = vld [vmem:[%s0 + $0x38] sm:$0xff]
  %vm118 = vcmp.ne.s32.totalorder %v110, 128
  %vm119 = vcmp.ne.s32.totalorder %v111, 128
  %vm120 = vcmp.ne.s32.totalorder %v112, 128
  %vm121 = vcmp.ne.s32.totalorder %v113, 128
  %vm122 = vcmp.ne.s32.totalorder %v114, 128
  %vm123 = vcmp.ne.s32.totalorder %v115, 128
  %vm124 = vcmp.ne.s32.totalorder %v116, 128
  %vm125 = vcmp.ne.s32.totalorder %v117, 128
  %vm126 = vcmp.ne.s32.totalorder %v110, 129
  %vm127 = vcmp.ne.s32.totalorder %v111, 129
  %vm128 = vcmp.ne.s32.totalorder %v112, 129
  %vm129 = vcmp.ne.s32.totalorder %v113, 129
  %vm130 = vcmp.ne.s32.totalorder %v114, 129
  %vm131 = vcmp.ne.s32.totalorder %v115, 129
  %vm132 = vcmp.ne.s32.totalorder %v116, 129
  %vm133 = vcmp.ne.s32.totalorder %v117, 129
  %vm134 = vmand %vm118, %vm126
  %vm135 = vmand %vm119, %vm127
  %vm136 = vmand %vm120, %vm128
  %vm137 = vmand %vm121, %vm129
  %vm138 = vmand %vm122, %vm130
  %vm139 = vmand %vm123, %vm131
  %vm140 = vmand %vm124, %vm132
  %vm141 = vmand %vm125, %vm133
  %v142 = vlaneseq
  %v143 = vand.u32 %v142, 127
  %144 = vset.pattern.permute.xlu0 0
  %145 = vperm.xlu0 %144, %v110
  %v146 = vpop.permute.xlu0 %145
  %147 = vset.pattern.permute.xlu0 0
  %148 = vperm.xlu0 %147, %v111
  %v149 = vpop.permute.xlu0 %148
  %150 = vset.pattern.permute.xlu0 0
  %151 = vperm.xlu0 %150, %v112
  %v152 = vpop.permute.xlu0 %151
  %153 = vset.pattern.permute.xlu0 0
  %154 = vperm.xlu0 %153, %v113
  %v155 = vpop.permute.xlu0 %154
  %156 = vset.pattern.permute.xlu0 0
  %157 = vperm.xlu0 %156, %v114
  %v158 = vpop.permute.xlu0 %157
  %159 = vset.pattern.permute.xlu0 0
  %160 = vperm.xlu0 %159, %v115
  %v161 = vpop.permute.xlu0 %160
  %162 = vset.pattern.permute.xlu0 0
  %163 = vperm.xlu0 %162, %v116
  %v164 = vpop.permute.xlu0 %163
  %165 = vset.pattern.permute.xlu0 0
  %166 = vperm.xlu0 %165, %v117
  %v167 = vpop.permute.xlu0 %166
  %vm168 = vcmp.eq.s32.totalorder %v146, %v143
  %vm169 = vcmp.eq.s32.totalorder %v149, %v143
  %vm170 = vcmp.eq.s32.totalorder %v152, %v143
  %vm171 = vcmp.eq.s32.totalorder %v155, %v143
  %vm172 = vcmp.eq.s32.totalorder %v158, %v143
  %vm173 = vcmp.eq.s32.totalorder %v161, %v143
  %vm174 = vcmp.eq.s32.totalorder %v164, %v143
  %vm175 = vcmp.eq.s32.totalorder %v167, %v143
  %v176 = vsel %vm134, 1, 0
  %v177 = vsel %vm135, 1, 0
  %v178 = vsel %vm136, 1, 0
  %v179 = vsel %vm137, 1, 0
  %v180 = vsel %vm138, 1, 0
  %v181 = vsel %vm139, 1, 0
  %v182 = vsel %vm140, 1, 0
  %v183 = vsel %vm141, 1, 0
  %184 = vset.pattern.permute.xlu0 0
  %185 = vperm.xlu0 %184, %v176
  %v186 = vpop.permute.xlu0 %185
  %187 = vset.pattern.permute.xlu0 0
  %188 = vperm.xlu0 %187, %v177
  %v189 = vpop.permute.xlu0 %188
  %190 = vset.pattern.permute.xlu0 0
  %191 = vperm.xlu0 %190, %v178
  %v192 = vpop.permute.xlu0 %191
  %193 = vset.pattern.permute.xlu0 0
  %194 = vperm.xlu0 %193, %v179
  %v195 = vpop.permute.xlu0 %194
  %196 = vset.pattern.permute.xlu0 0
  %197 = vperm.xlu0 %196, %v180
  %v198 = vpop.permute.xlu0 %197
  %199 = vset.pattern.permute.xlu0 0
  %200 = vperm.xlu0 %199, %v181
  %v201 = vpop.permute.xlu0 %200
  %202 = vset.pattern.permute.xlu0 0
  %203 = vperm.xlu0 %202, %v182
  %v204 = vpop.permute.xlu0 %203
  %205 = vset.pattern.permute.xlu0 0
  %206 = vperm.xlu0 %205, %v183
  %v207 = vpop.permute.xlu0 %206
  %vm208 = vcmp.eq.s32.totalorder %v186, 1
  %vm209 = vcmp.eq.s32.totalorder %v189, 1
  %vm210 = vcmp.eq.s32.totalorder %v192, 1
  %vm211 = vcmp.eq.s32.totalorder %v195, 1
  %vm212 = vcmp.eq.s32.totalorder %v198, 1
  %vm213 = vcmp.eq.s32.totalorder %v201, 1
  %vm214 = vcmp.eq.s32.totalorder %v204, 1
  %vm215 = vcmp.eq.s32.totalorder %v207, 1
  %vm216 = vmand %vm208, %vm168
  %vm217 = vmand %vm209, %vm169
  %vm218 = vmand %vm210, %vm170
  %vm219 = vmand %vm211, %vm171
  %vm220 = vmand %vm212, %vm172
  %vm221 = vmand %vm213, %vm173
  %vm222 = vmand %vm214, %vm174
  %vm223 = vmand %vm215, %vm175
  %v224 = vsel %vm216, 1, 0
  %v225 = vsel %vm217, 1, 0
  %v226 = vsel %vm218, 1, 0
  %v227 = vsel %vm219, 1, 0
  %v228 = vsel %vm220, 1, 0
  %v229 = vsel %vm221, 1, 0
  %v230 = vsel %vm222, 1, 0
  %v231 = vsel %vm223, 1, 0
  %v232 = vcvt.s32.f32 %v224
  %v233 = vcvt.s32.f32 %v225
  %v234 = vcvt.s32.f32 %v226
  %v235 = vcvt.s32.f32 %v227
  %v236 = vcvt.s32.f32 %v228
  %v237 = vcvt.s32.f32 %v229
  %v238 = vcvt.s32.f32 %v230
  %v239 = vcvt.s32.f32 %v231
  %v240 = vlaneseq
  %v241 = vshrl.u32 %v240, 7
  %v242 = vmul.u32 %v241, 8
  %vm243 = vcmp.ge.s32.totalorder %v143, %v242
  %v244 = vadd.s32 %v241, 1
  %v245 = vmul.u32 %v244, 8
  %vm246 = vcmp.lt.s32.totalorder %v143, %v245
  %vm247 = vmand %vm243, %vm246
  %v248 = vsel %vm247, 1, 0
  %v249 = vcvt.s32.f32 %v248
  %vm250 = vcmask 523264
  %v252 = vsel %vm250, %v249, 0
  %254 = vmatprep.subr.mxu0 0.0
  %255 = vmatpush1.msra.mxu0 %v232
  %256 = vmatprep.subr.mxu0 0.0
  %257 = vmatpush1.msra.mxu0 %v233
  %258 = vmatprep.subr.mxu0 0.0
  %259 = vmatpush1.msra.mxu0 %v234
  %260 = vmatprep.subr.mxu0 0.0
  %261 = vmatpush1.msra.mxu0 %v235
  %262 = vmatprep.subr.mxu0 0.0
  %263 = vmatpush1.msra.mxu0 %v236
  %264 = vmatprep.subr.mxu0 0.0
  %265 = vmatpush1.msra.mxu0 %v237
  %266 = vmatprep.subr.mxu0 0.0
  %267 = vmatpush1.msra.mxu0 %v238
  %268 = vmatprep.subr.mxu0 0.0
  %269 = vmatpush1.msra.mxu0 %v239
  %270 = vmatprep.subr.mxu0 0.0
  %271 = vmatpush1.msra.mxu0 0.0
  %272 = vmatprep.subr.mxu0 0.0
  %273 = vmatpush1.msra.mxu0 0.0
  %274 = vmatprep.subr.mxu0 0.0
  %275 = vmatpush1.msra.mxu0 0.0
  %276 = vmatprep.subr.mxu0 0.0
  %277 = vmatpush1.msra.mxu0 0.0
  %278 = vmatprep.subr.mxu0 0.0
  %279 = vmatpush1.msra.mxu0 0.0
  %280 = vmatprep.subr.mxu0 0.0
  %281 = vmatpush1.msra.mxu0 0.0
  %282 = vmatprep.subr.mxu0 0.0
  %283 = vmatpush1.msra.mxu0 0.0
  %284 = vmatprep.subr.mxu0 0.0
  %285 = vmatpush1.msra.mxu0 0.0
  %286 = vmatprep.subr.mxu0 0.0
  %287 = vmatpush1.msra.mxu0 0.0
  %288 = vmatprep.subr.mxu0 0.0
  %289 = vmatpush1.msra.mxu0 0.0
  %290 = vmatprep.subr.mxu0 0.0
  %291 = vmatpush1.msra.mxu0 0.0
  %292 = vmatprep.subr.mxu0 0.0
  %293 = vmatpush1.msra.mxu0 0.0
  %294 = vmatprep.subr.mxu0 0.0
  %295 = vmatpush1.msra.mxu0 0.0
  %296 = vmatprep.subr.mxu0 0.0
  %297 = vmatpush1.msra.mxu0 0.0
  %298 = vmatprep.subr.mxu0 0.0
  %299 = vmatpush1.msra.mxu0 0.0
  %300 = vmatprep.subr.mxu0 0.0
  %301 = vmatpush1.msra.mxu0 0.0
  %302 = vmatprep.subr.mxu0 0.0
  %303 = vmatpush1.msra.mxu0 0.0
  %304 = vmatprep.subr.mxu0 0.0
  %305 = vmatpush1.msra.mxu0 0.0
  %306 = vmatprep.subr.mxu0 0.0
  %307 = vmatpush1.msra.mxu0 0.0
  %308 = vmatprep.subr.mxu0 0.0
  %309 = vmatpush1.msra.mxu0 0.0
  %310 = vmatprep.subr.mxu0 0.0
  %311 = vmatpush1.msra.mxu0 0.0
  %312 = vmatprep.subr.mxu0 0.0
  %313 = vmatpush1.msra.mxu0 0.0
  %314 = vmatprep.subr.mxu0 0.0
  %315 = vmatpush1.msra.mxu0 0.0
  %316 = vmatprep.subr.mxu0 0.0
  %317 = vmatpush1.msra.mxu0 0.0
  %318 = vmatprep.mubr.f32.mxu0 0.0
  %319 = vmatmul.mubr.f32.gmra.mrb[0].mxu0 %v252
  %v320 = vpop.f32.mrb[0].mxu0
  %v321 = vadd.f32 0.0, %v320
  %v322 = vpop.f32.mrb[0].mxu0
  %323 = vdwg.mxu0
  %324 = vadd.xlane.f32.xlu0 %v321
  %v325 = vpop.xlane.xlu0 %324
  %v326 = vlaneseq
  %v327 = vshrl.u32 %v326, 7
  %v328 = vsub.s32 0, %v327
  %v329 = vrot.slane %v109, %v328
  %v330 = vmul.f32 %v321, %v329
  %331 = vadd.xlane.f32.xlu0 %v330
  %v332 = vpop.xlane.xlu0 %331
  %vm333 = vcmp.lt.f32.partialorder %v325, 0.5
  %vm334 = vmxor %vm333, 1
  %v335 = vmax.f32 %v325, 1.0
  %v336 = vrcp.pop %v335
  %v337 = vmul.f32 1.0, %v336
  %v338 = vld [vmem:[%s3] sm:$0xff]
  %v339 = vld [vmem:[%s3 + $0x8] sm:$0xff]
  %v340 = vld [vmem:[%s3 + $0x10] sm:$0xff]
  %v341 = vld [vmem:[%s3 + $0x18] sm:$0xff]
  %v342 = vld [vmem:[%s3 + $0x20] sm:$0xff]
  %v343 = vld [vmem:[%s3 + $0x28] sm:$0xff]
  %v344 = vld [vmem:[%s3 + $0x30] sm:$0xff]
  %v345 = vld [vmem:[%s3 + $0x38] sm:$0xff]
  %v346 = vld [vmem:[%s3 + $0x40] sm:$0xff]
  %v347 = vld [vmem:[%s3 + $0x48] sm:$0xff]
  %v348 = vld [vmem:[%s3 + $0x50] sm:$0xff]
  %v349 = vld [vmem:[%s3 + $0x58] sm:$0xff]
  %v350 = vld [vmem:[%s3 + $0x60] sm:$0xff]
  %v351 = vld [vmem:[%s3 + $0x68] sm:$0xff]
  %v352 = vld [vmem:[%s3 + $0x70] sm:$0xff]
  %v353 = vld [vmem:[%s3 + $0x78] sm:$0xff]
  %354 = vmatprep.subr.mxu0 0.0
  %355 = vmatpush1.msra.mxu0 %v338
  %356 = vmatprep.subr.mxu0 0.0
  %357 = vmatpush1.msra.mxu0 %v339
  %358 = vmatprep.subr.mxu0 0.0
  %359 = vmatpush1.msra.mxu0 %v340
  %360 = vmatprep.subr.mxu0 0.0
  %361 = vmatpush1.msra.mxu0 %v341
  %362 = vmatprep.subr.mxu0 0.0
  %363 = vmatpush1.msra.mxu0 %v342
  %364 = vmatprep.subr.mxu0 0.0
  %365 = vmatpush1.msra.mxu0 %v343
  %366 = vmatprep.subr.mxu0 0.0
  %367 = vmatpush1.msra.mxu0 %v344
  %368 = vmatprep.subr.mxu0 0.0
  %369 = vmatpush1.msra.mxu0 %v345
  %370 = vmatprep.subr.mxu0 0.0
  %371 = vmatpush1.msra.mxu0 %v346
  %372 = vmatprep.subr.mxu0 0.0
  %373 = vmatpush1.msra.mxu0 %v347
  %374 = vmatprep.subr.mxu0 0.0
  %375 = vmatpush1.msra.mxu0 %v348
  %376 = vmatprep.subr.mxu0 0.0
  %377 = vmatpush1.msra.mxu0 %v349
  %378 = vmatprep.subr.mxu0 0.0
  %379 = vmatpush1.msra.mxu0 %v350
  %380 = vmatprep.subr.mxu0 0.0
  %381 = vmatpush1.msra.mxu0 %v351
  %382 = vmatprep.subr.mxu0 0.0
  %383 = vmatpush1.msra.mxu0 %v352
  %384 = vmatprep.subr.mxu0 0.0
  %385 = vmatpush1.msra.mxu0 %v353
  %386 = vmatprep.subr.mxu0 0.0
  %387 = vmatpush1.msra.mxu0 0.0
  %388 = vmatprep.subr.mxu0 0.0
  %389 = vmatpush1.msra.mxu0 0.0
  %390 = vmatprep.subr.mxu0 0.0
  %391 = vmatpush1.msra.mxu0 0.0
  %392 = vmatprep.subr.mxu0 0.0
  %393 = vmatpush1.msra.mxu0 0.0
  %394 = vmatprep.subr.mxu0 0.0
  %395 = vmatpush1.msra.mxu0 0.0
  %396 = vmatprep.subr.mxu0 0.0
  %397 = vmatpush1.msra.mxu0 0.0
  %398 = vmatprep.subr.mxu0 0.0
  %399 = vmatpush1.msra.mxu0 0.0
  %400 = vmatprep.subr.mxu0 0.0
  %401 = vmatpush1.msra.mxu0 0.0
  %402 = vmatprep.subr.mxu0 0.0
  %403 = vmatpush1.msra.mxu0 0.0
  %404 = vmatprep.subr.mxu0 0.0
  %405 = vmatpush1.msra.mxu0 0.0
  %406 = vmatprep.subr.mxu0 0.0
  %407 = vmatpush1.msra.mxu0 0.0
  %408 = vmatprep.subr.mxu0 0.0
  %409 = vmatpush1.msra.mxu0 0.0
  %410 = vmatprep.subr.mxu0 0.0
  %411 = vmatpush1.msra.mxu0 0.0
  %412 = vmatprep.subr.mxu0 0.0
  %413 = vmatpush1.msra.mxu0 0.0
  %414 = vmatprep.subr.mxu0 0.0
  %415 = vmatpush1.msra.mxu0 0.0
  %416 = vmatprep.subr.mxu0 0.0
  %417 = vmatpush1.msra.mxu0 0.0
  %418 = vmatprep.mubr.f32.mxu0 0.0
  %419 = vmatmul.mubr.f32.gmra.mrb[0].mxu0 %v321
  %v420 = vpop.f32.mrb[0].mxu0
  %v421 = vadd.f32 0.0, %v420
  %v422 = vpop.f32.mrb[0].mxu0
  %423 = vdwg.mxu0
  %v424 = vmul.f32 %v421, %v337
  %v425 = vsel %vm333, -inf, %v332
  %vm426 = vcmp.ge.s32.totalorder %v241, 0
  %vm427 = vcmp.lt.s32.totalorder %v241, 4
  %vm428 = vmand %vm426, %vm427
  %vm429 = vmand %vm428, %vm334
  %v430 = vsel %vm429, %v332, -3e+38
  %v431 = vrot.slane %v430, 4
  %v432 = vmax.f32 %v430, %v431
  %v433 = vrot.slane %v432, 2
  %v434 = vmax.f32 %v432, %v433
  %v435 = vrot.slane %v434, 1
  %v436 = vmax.f32 %v434, %v435
  %vm437 = vcmp.lt.f32.partialorder %v436, -1e+30
  %v438 = vsel %vm437, 0.0, %v436
  %v439 = vsub.f32 %v332, %v438
  %v440 = vmul.f32 %v439, 1.442695
  %v441 = vpow.pop %v440
  %v442 = vsel %vm429, %v441, 0.0
  %v443 = vrot.slane %v442, 4
  %v444 = vadd.f32 %v442, %v443
  %v445 = vrot.slane %v444, 2
  %v446 = vadd.f32 %v444, %v445
  %v447 = vrot.slane %v446, 1
  %v448 = vadd.f32 %v446, %v447
  %vm449 = vcmp.gt.f32.partialorder %v448, 0.0
  %v450 = vrcp.pop %v448
  %v451 = vmul.f32 %v442, %v450
  %v452 = vsel %vm449, 1, 0
  %vm453 = vcmp.eq.s32.totalorder %v452, 1
  %v454 = vsel %vm453, %v451, 0.0
  %v455 = vadd.f32 %v454, 0.0
  %vm456 = vcmp.ge.s32.totalorder %v241, 4
  %vm457 = vcmp.lt.s32.totalorder %v241, 8
  %vm458 = vmand %vm456, %vm457
  %vm459 = vmand %vm458, %vm334
  %v460 = vsel %vm459, %v332, -3e+38
  %v461 = vrot.slane %v460, 4
  %v462 = vmax.f32 %v460, %v461
  %v463 = vrot.slane %v462, 2
  %v464 = vmax.f32 %v462, %v463
  %v465 = vrot.slane %v464, 1
  %v466 = vmax.f32 %v464, %v465
  %vm467 = vcmp.lt.f32.partialorder %v466, -1e+30
  %v468 = vsel %vm467, 0.0, %v466
  %v469 = vsub.f32 %v332, %v468
  %v470 = vmul.f32 %v469, 1.442695
  %v471 = vpow.pop %v470
  %v472 = vsel %vm459, %v471, 0.0
  %v473 = vrot.slane %v472, 4
  %v474 = vadd.f32 %v472, %v473
  %v475 = vrot.slane %v474, 2
  %v476 = vadd.f32 %v474, %v475
  %v477 = vrot.slane %v476, 1
  %v478 = vadd.f32 %v476, %v477
  %vm479 = vcmp.gt.f32.partialorder %v478, 0.0
  %v480 = vrcp.pop %v478
  %v481 = vmul.f32 %v472, %v480
  %v482 = vsel %vm479, 1, 0
  %vm483 = vcmp.eq.s32.totalorder %v482, 1
  %v484 = vsel %vm483, %v481, 0.0
  %v485 = vadd.f32 %v455, %v484
  %v486 = vmul.u32 %v241, 4
  %vm487 = vcmp.ge.s32.totalorder %v143, %v486
  %v488 = vmul.u32 %v244, 4
  %vm489 = vcmp.lt.s32.totalorder %v143, %v488
  %vm490 = vmand %vm487, %vm489
  %v491 = vsel %vm490, 1, 0
  %v492 = vcvt.s32.f32 %v491
  %v493 = vmul.f32 %v485, %v424
  %vm494 = vcmask 64512
  %v496 = vsel %vm494, %v492, 0
  %498 = vmatprep.subr.mxu0 0.0
  %499 = vmatpush1.msra.mxu0 %v493
  %500 = vmatprep.subr.mxu0 0.0
  %501 = vmatpush1.msra.mxu0 0.0
  %502 = vmatprep.subr.mxu0 0.0
  %503 = vmatpush1.msra.mxu0 0.0
  %504 = vmatprep.subr.mxu0 0.0
  %505 = vmatpush1.msra.mxu0 0.0
  %506 = vmatprep.subr.mxu0 0.0
  %507 = vmatpush1.msra.mxu0 0.0
  %508 = vmatprep.subr.mxu0 0.0
  %509 = vmatpush1.msra.mxu0 0.0
  %510 = vmatprep.subr.mxu0 0.0
  %511 = vmatpush1.msra.mxu0 0.0
  %512 = vmatprep.subr.mxu0 0.0
  %513 = vmatpush1.msra.mxu0 0.0
  %514 = vmatprep.subr.mxu0 0.0
  %515 = vmatpush1.msra.mxu0 0.0
  %516 = vmatprep.subr.mxu0 0.0
  %517 = vmatpush1.msra.mxu0 0.0
  %518 = vmatprep.subr.mxu0 0.0
  %519 = vmatpush1.msra.mxu0 0.0
  %520 = vmatprep.subr.mxu0 0.0
  %521 = vmatpush1.msra.mxu0 0.0
  %522 = vmatprep.subr.mxu0 0.0
  %523 = vmatpush1.msra.mxu0 0.0
  %524 = vmatprep.subr.mxu0 0.0
  %525 = vmatpush1.msra.mxu0 0.0
  %526 = vmatprep.subr.mxu0 0.0
  %527 = vmatpush1.msra.mxu0 0.0
  %528 = vmatprep.subr.mxu0 0.0
  %529 = vmatpush1.msra.mxu0 0.0
  %530 = vmatprep.subr.mxu0 0.0
  %531 = vmatpush1.msra.mxu0 0.0
  %532 = vmatprep.subr.mxu0 0.0
  %533 = vmatpush1.msra.mxu0 0.0
  %534 = vmatprep.subr.mxu0 0.0
  %535 = vmatpush1.msra.mxu0 0.0
  %536 = vmatprep.subr.mxu0 0.0
  %537 = vmatpush1.msra.mxu0 0.0
  %538 = vmatprep.subr.mxu0 0.0
  %539 = vmatpush1.msra.mxu0 0.0
  %540 = vmatprep.subr.mxu0 0.0
  %541 = vmatpush1.msra.mxu0 0.0
  %542 = vmatprep.subr.mxu0 0.0
  %543 = vmatpush1.msra.mxu0 0.0
  %544 = vmatprep.subr.mxu0 0.0
  %545 = vmatpush1.msra.mxu0 0.0
  %546 = vmatprep.subr.mxu0 0.0
  %547 = vmatpush1.msra.mxu0 0.0
  %548 = vmatprep.subr.mxu0 0.0
  %549 = vmatpush1.msra.mxu0 0.0
  %550 = vmatprep.subr.mxu0 0.0
  %551 = vmatpush1.msra.mxu0 0.0
  %552 = vmatprep.subr.mxu0 0.0
  %553 = vmatpush1.msra.mxu0 0.0
  %554 = vmatprep.subr.mxu0 0.0
  %555 = vmatpush1.msra.mxu0 0.0
  %556 = vmatprep.subr.mxu0 0.0
  %557 = vmatpush1.msra.mxu0 0.0
  %558 = vmatprep.subr.mxu0 0.0
  %559 = vmatpush1.msra.mxu0 0.0
  %560 = vmatprep.subr.mxu0 0.0
  %561 = vmatpush1.msra.mxu0 0.0
  %562 = vmatprep.mubr.f32.mxu0 0.0
  %563 = vmatmul.mubr.f32.gmra.mrb[0].mxu0 %v496
  %v564 = vpop.f32.mrb[0].mxu0
  %v565 = vadd.f32 0.0, %v564
  %v566 = vpop.f32.mrb[0].mxu0
  %567 = vdwg.mxu0
  %v568 = vsel %vm334, 1, 0
  %v569 = vcvt.s32.f32 %v568
  %v570 = vsub.f32 0.0, %v332
  %v571 = vmul.f32 %v570, %v485
  %v572 = vmul.f32 %v571, %v337
  %v573 = vsel %vm333, 0.0, %v572
  %v574 = vrot.slane %v573, 4
  %v575 = vadd.f32 %v573, %v574
  %v576 = vrot.slane %v575, 2
  %v577 = vadd.f32 %v575, %v576
  %v578 = vrot.slane %v577, 1
  %v579 = vadd.f32 %v577, %v578
  %v580 = vrot.slane %v569, 4
  %v581 = vadd.f32 %v569, %v580
  %v582 = vrot.slane %v581, 2
  %v583 = vadd.f32 %v581, %v582
  %v584 = vrot.slane %v583, 1
  %v585 = vadd.f32 %v583, %v584
  %v586 = vmax.f32 %v585, 1.0
  %v587 = vrcp.pop %v586
  %v588 = vmul.f32 %v579, %v587
  %vm589 = vcmp.eq.s32.totalorder %v143, 32
  %vm590 = vcmp.eq.s32.totalorder %v143, 33
  %v591 = vsel %vm590, %v425, %v424
  %v592 = vsel %vm589, %v485, %v591
  %vm593 = vcmp.eq.s32.totalorder %v241, 0
  %vm594 = vmand %vm593, %vm589
  %v595 = vsel %vm594, %v588, %v565
  %596 = vst [vmem:[%s4] sm:$0xff] %v592
  %597 = vst [vmem:[%s4 + $0x8] sm:$0xff] %v595
  // Predicated region
  $region18: #{optok_forward.1} parent=0 // pred_check
    _
  $region19: #{optok_forward.1} parent=0 // pred_check_branch
    %599 = sbr.rel (0) target = $region21
  $region20: #{optok_forward.1} parent=0 // pred_region
    _
  $region21: #{optok_forward.1} parent=0 // pred_fallthru
    _
  // Predicated region
  $region22: #{optok_forward.1} parent=0 // pred_check
    _
  $region23: #{optok_forward.1} parent=0 // pred_check_branch
    %601 = sbr.rel (0) target = $region25
  $region24: #{optok_forward.1} parent=0 // pred_region
    _
  $region25: #{optok_forward.1} parent=0 // pred_fallthru
    _

</llo_original>
